<compile_context>
chip_gen: v7x
topology: tpu7x:2x2x1
jax: 0.10.0
libtpu: 0.0.40
codegen_flags: <defaults>
</compile_context>

<pallas_src>
import functools

import jax
import jax.numpy as jnp
from jax import lax
from jax.experimental import pallas as pl
from jax.experimental.pallas import tpu as pltpu


_LANE = 128
_OUT_P = 128  # lane-dense output slab width; column 0 holds the real output


def _round_up(x: int, m: int) -> int:
    return (x + m - 1) // m * m


def _sublane(dtype) -> int:
    # rows packed per vreg sublane for this dtype (f32:8, bf16:16, int8/fp8:32)
    return {4: 8, 2: 16, 1: 32}[jnp.dtype(dtype).itemsize]


def _usable_vmem_bytes() -> int:
    cap = 64 << 20  # conservative fallback (v7x per-TC size)
    try:
        cap = int(pltpu.get_tpu_info().vmem_capacity_bytes)
    except Exception:
        pass
    # leave headroom for compiler-internal scratch: 128MiB->112MiB, 64MiB->56MiB
    return cap - max(cap // 8, 8 << 20)


# --------------------------------------------------------------------------
# Kernels
# --------------------------------------------------------------------------
def _resident_kernel(x_ref, w_in_ref, b_in_ref, w_h_ref, b_h_ref, w_out_ref,
                     o_ref, h_ref, *, depth: int):
    """Whole weight stack resident in VMEM; loop over layers in-kernel."""
    acc = jnp.dot(x_ref[...], w_in_ref[...], preferred_element_type=jnp.float32)
    h_ref[...] = jnp.maximum(acc + b_in_ref[...], 0.0).astype(h_ref.dtype)

    if depth > 0:
        def body(i, carry):
            a = jnp.dot(h_ref[...], w_h_ref[i],
                        preferred_element_type=jnp.float32)
            h_ref[...] = jnp.maximum(a + b_h_ref[i], 0.0).astype(h_ref.dtype)
            return carry
        lax.fori_loop(0, depth, body, 0, unroll=depth <= 8)

    o_ref[...] = jnp.dot(h_ref[...], w_out_ref[...],
                         preferred_element_type=jnp.float32).astype(o_ref.dtype)


def _streaming_kernel(x_ref, w_in_ref, b_in_ref, w_h_ref, b_h_ref, w_out_ref,
                      o_ref, h_ref, *, has_hidden: bool):
    """One hidden layer's weights streamed per depth grid step."""
    k = pl.program_id(1)
    nk = pl.num_programs(1)

    @pl.when(k == 0)
    def _input_layer():
        acc = jnp.dot(x_ref[...], w_in_ref[...],
                      preferred_element_type=jnp.float32)
        h_ref[...] = jnp.maximum(acc + b_in_ref[...], 0.0).astype(h_ref.dtype)

    if has_hidden:
        acc = jnp.dot(h_ref[...], w_h_ref[...],
                      preferred_element_type=jnp.float32)
        h_ref[...] = jnp.maximum(acc + b_h_ref[...], 0.0).astype(h_ref.dtype)

    @pl.when(k == nk - 1)
    def _output_layer():
        o_ref[...] = jnp.dot(h_ref[...], w_out_ref[...],
                             preferred_element_type=jnp.float32
                             ).astype(o_ref.dtype)


# --------------------------------------------------------------------------
# Wrapper
# --------------------------------------------------------------------------
def prepare_params(w_in, b_in, w_h, b_h, w_out, *, compute_dtype=jnp.bfloat16):
    """Pad / cast the weights once (call at model init, NOT per forward).

    Layouts (already transposed vs. PyTorch's (out, in)):
      w_in  : (input_dim, hidden)
      b_in  : (hidden,) or (1, hidden)                       (kept float32)
      w_h   : (depth, hidden, hidden)
      b_h   : (depth, hidden) or (depth, 1, hidden)          (kept float32)
      w_out : (hidden, 1)
    """
    cdt = jnp.dtype(compute_dtype)
    D, H = w_in.shape
    depth = int(w_h.shape[0])
    n_hidden = max(depth, 1)
    D_p, H_p = _round_up(D, _LANE), _round_up(H, _LANE)

    def _pad(a, shape, dtype):
        a = a.astype(dtype)
        if a.shape == shape:
            return a
        return jnp.zeros(shape, dtype).at[tuple(slice(0, s) for s in a.shape)].set(a)

    w_in_p = _pad(w_in, (D_p, H_p), cdt)
    b_in_p = _pad(jnp.reshape(b_in, (1, H)), (1, H_p), jnp.float32)
    w_h_p = jnp.zeros((n_hidden, H_p, H_p), cdt)
    b_h_p = jnp.zeros((n_hidden, 1, H_p), jnp.float32)
    if depth > 0:
        w_h_p = w_h_p.at[:, :H, :H].set(w_h.astype(cdt))
        b_h_p = b_h_p.at[:, :, :H].set(
            jnp.reshape(b_h, (depth, 1, H)).astype(jnp.float32))
    w_out_p = _pad(w_out, (H_p, _OUT_P), cdt)

    return dict(w_in=w_in_p, b_in=b_in_p, w_h=w_h_p, b_h=b_h_p, w_out=w_out_p,
                depth=depth, input_dim=D, hidden=H, compute_dtype=cdt)


def deep_neural_network_forward(x, params, *, tm=512, force_streaming=False):
    """x: (B, input_dim) float32 -> (B, 1) float32."""
    B, D = x.shape
    assert D == params["input_dim"]
    cdt = params["compute_dtype"]
    depth = params["depth"]
    n_hidden = max(depth, 1)
    w_in_p, b_in_p = params["w_in"], params["b_in"]
    w_h_p, b_h_p, w_out_p = params["w_h"], params["b_h"], params["w_out"]
    D_p, H_p = w_in_p.shape
    cb = cdt.itemsize
    sub = _sublane(cdt)

    vmem_cap = _usable_vmem_bytes()

    # ---- choose path (resident weight stack vs. per-layer streaming) ----
    w_resident = n_hidden * H_p * H_p * cb + n_hidden * 8 * H_p * 4
    w_streamed = 2 * H_p * H_p * cb + 2 * 8 * H_p * 4     # double-buffered layer
    fixed = D_p * H_p * cb + 8 * H_p * 4 + H_p * _OUT_P * cb  # w_in + b_in + w_out
    resident = (not force_streaming) and (w_resident <= vmem_cap // 2)
    w_bytes = w_resident if resident else w_streamed

    def _tile_bytes(tile_m):
        return (2 * tile_m * D_p * cb        # x  (double-buffered)
                + 2 * tile_m * _OUT_P * 4    # out (double-buffered, f32)
                + tile_m * H_p * cb)         # carried h scratch

    TM = _round_up(min(tm, _round_up(B, sub)), sub)
    while TM > sub and fixed + w_bytes + _tile_bytes(TM) > vmem_cap:
        TM = _round_up(TM // 2, sub)
    B_p = _round_up(B, TM)

    footprint = fixed + w_bytes + _tile_bytes(TM)
    vmem_limit = int(max(min(footprint + (2 << 20), vmem_cap), 16 << 20))

    # ---- pad the batch input (cheap vs. weight traffic) ----
    x_p = x.astype(cdt)
    if x_p.shape != (B_p, D_p):
        x_p = jnp.zeros((B_p, D_p), cdt).at[:B, :D].set(x_p)

    single = pl.Buffered(1)  # grid-invariant inputs: no double buffer

    if resident:
        grid = (B_p // TM,)
        in_specs = [
            pl.BlockSpec((TM, D_p), lambda m: (m, 0)),
            pl.BlockSpec((D_p, H_p), lambda m: (0, 0), pipeline_mode=single),
            pl.BlockSpec((1, H_p), lambda m: (0, 0), pipeline_mode=single),
            pl.BlockSpec((n_hidden, H_p, H_p), lambda m: (0, 0, 0),
                         pipeline_mode=single),
            pl.BlockSpec((n_hidden, 1, H_p), lambda m: (0, 0, 0),
                         pipeline_mode=single),
            pl.BlockSpec((H_p, _OUT_P), lambda m: (0, 0), pipeline_mode=single),
        ]
        out_specs = pl.BlockSpec((TM, _OUT_P), lambda m: (m, 0))
        kernel = functools.partial(_resident_kernel, depth=depth)
        dim_sem = ("parallel",)
    else:
        grid = (B_p // TM, n_hidden)
        in_specs = [
            pl.BlockSpec((TM, D_p), lambda m, k: (m, 0)),
            pl.BlockSpec((D_p, H_p), lambda m, k: (0, 0), pipeline_mode=single),
            pl.BlockSpec((1, H_p), lambda m, k: (0, 0), pipeline_mode=single),
            pl.BlockSpec((pl.Squeezed(), H_p, H_p), lambda m, k: (k, 0, 0)),
            pl.BlockSpec((pl.Squeezed(), 1, H_p), lambda m, k: (k, 0, 0)),
            pl.BlockSpec((H_p, _OUT_P), lambda m, k: (0, 0), pipeline_mode=single),
        ]
        out_specs = pl.BlockSpec((TM, _OUT_P), lambda m, k: (m, 0))
        kernel = functools.partial(_streaming_kernel, has_hidden=depth > 0)
        dim_sem = ("parallel", "arbitrary")

    out_p = pl.pallas_call(
        kernel,
        out_shape=jax.ShapeDtypeStruct((B_p, _OUT_P), jnp.float32),
        grid_spec=pltpu.PrefetchScalarGridSpec(
            num_scalar_prefetch=0,
            grid=grid,
            in_specs=in_specs,
            out_specs=out_specs,
            scratch_shapes=[pltpu.VMEM((TM, H_p), cdt)],   # carried activation
        ),
        compiler_params=pltpu.CompilerParams(
            dimension_semantics=dim_sem,
            vmem_limit_bytes=vmem_limit,
        ),
    )(x_p, w_in_p, b_in_p, w_h_p, b_h_p, w_out_p)

    return out_p[:B, :1]


# --------------------------------------------------------------------------
# Self-test
# --------------------------------------------------------------------------
def _xavier_uniform(key, shape):
    # shape = (fan_out, fan_in), like torch.nn.Linear.weight
    fan_out, fan_in = shape
    limit = (6.0 / (fan_in + fan_out)) ** 0.5
    return jax.random.uniform(key, shape, jnp.float32, -limit, limit)


if __name__ == "__main__":
    batch, input_dim, hidden, depth = 8, 16, 32, 3

    key = jax.random.PRNGKey(0)
    keys = jax.random.split(key, 4 + depth)

    x = jax.random.normal(keys[0], (batch, input_dim), jnp.float32)

    # Parameters in PyTorch layout (out, in), then transposed for the kernel.
    w_in_pt = _xavier_uniform(keys[1], (hidden, input_dim))
    b_in = jnp.zeros((hidden,), jnp.float32)
    w_h_pt = jnp.stack(
        [_xavier_uniform(keys[2 + i], (hidden, hidden)) for i in range(depth)])
    b_h = jnp.zeros((depth, hidden), jnp.float32)
    w_out_pt = _xavier_uniform(keys[2 + depth], (1, hidden))

    # Transpose to (in, out) so the kernel computes x @ W.
    w_in = w_in_pt.T                          # (input_dim, hidden)
    w_h = jnp.transpose(w_h_pt, (0, 2, 1))    # (depth, hidden, hidden)
    w_out = w_out_pt.T                        # (hidden, 1)

    # Plain-JAX reference (same math as the PyTorch module, f32).
    h_ref = jnp.maximum(x @ w_in + b_in[None, :], 0.0)
    for i in range(depth):
        h_ref = jnp.maximum(h_ref @ w_h[i] + b_h[i][None, :], 0.0)
    ref = h_ref @ w_out

    # 1) f32 streaming path (strict correctness check).
    params_f32 = prepare_params(w_in, b_in, w_h, b_h, w_out,
                                compute_dtype=jnp.float32)
    out_f32 = jax.block_until_ready(
        deep_neural_network_forward(x, params_f32, force_streaming=True))
    assert out_f32.shape == (batch, 1)
    assert jnp.allclose(out_f32, ref, atol=1e-5, rtol=1e-5), (
        f"f32 max abs err {jnp.max(jnp.abs(out_f32 - ref))}")

    # 2) Default bf16 resident-weight path (loose check: bf16 rounding drift).
    params_bf16 = prepare_params(w_in, b_in, w_h, b_h, w_out)  # bf16 default
    out_bf16 = jax.block_until_ready(
        deep_neural_network_forward(x, params_bf16))
    assert out_bf16.shape == (batch, 1)
    assert jnp.allclose(out_bf16, ref, atol=5e-2, rtol=5e-2), (
        f"bf16 max abs err {jnp.max(jnp.abs(out_bf16 - ref))}")

    print("KERNEL_OK")
</pallas_src>

<mosaic_0001>
module attributes {stable_mosaic.version = 11 : i64} {
  func.func @_streaming_kernel(%arg0: i32, %arg1: i32, %arg2: memref<8x128xf32, #tpu.memory_space<vmem>>, %arg3: memref<128x128xf32, #tpu.memory_space<vmem>>, %arg4: memref<1x128xf32, #tpu.memory_space<vmem>>, %arg5: memref<1x128x128xf32, #tpu.memory_space<vmem>>, %arg6: memref<1x1x128xf32, #tpu.memory_space<vmem>>, %arg7: memref<128x128xf32, #tpu.memory_space<vmem>>, %arg8: memref<8x128xf32, #tpu.memory_space<vmem>>, %arg9: memref<8x128xf32, #tpu.memory_space<vmem>>) attributes {dimension_semantics = [#tpu.dimension_semantics<parallel>, #tpu.dimension_semantics<arbitrary>], iteration_bounds = array<i64: 1, 3>, scalar_prefetch = 0 : i64, scratch_operands = 1 : i64, tpu.core_type = #tpu.core_type<tc>, window_params = [{transform_indices = @transform_0, window_bounds = array<i64: 8, 128>}, {pipeline_mode = #tpu.pipeline_mode<synchronous>, transform_indices = @transform_1, window_bounds = array<i64: 128, 128>}, {pipeline_mode = #tpu.pipeline_mode<synchronous>, transform_indices = @transform_2, window_bounds = array<i64: 1, 128>}, {transform_indices = @transform_3, window_bounds = array<i64: 1, 128, 128>}, {transform_indices = @transform_4, window_bounds = array<i64: 1, 1, 128>}, {pipeline_mode = #tpu.pipeline_mode<synchronous>, transform_indices = @transform_5, window_bounds = array<i64: 128, 128>}, {transform_indices = @transform_6, window_bounds = array<i64: 8, 128>}]} {
    %c0_i32 = arith.constant 0 : i32
    %0 = arith.cmpi eq, %arg1, %c0_i32 : i32
    %1 = arith.extui %0 : i1 to i32
    %c0_i32_0 = arith.constant 0 : i32
    %2 = arith.cmpi ne, %1, %c0_i32_0 : i32
    scf.if %2 {
      %c0_12 = arith.constant 0 : index
      %c0_13 = arith.constant 0 : index
      %17 = vector.load %arg2[%c0_12, %c0_13] : memref<8x128xf32, #tpu.memory_space<vmem>>, vector<8x128xf32>
      %c0_14 = arith.constant 0 : index
      %c0_15 = arith.constant 0 : index
      %18 = vector.load %arg3[%c0_14, %c0_15] : memref<128x128xf32, #tpu.memory_space<vmem>>, vector<128x128xf32>
      %cst_16 = arith.constant dense<0.000000e+00> : vector<8x128xf32>
      %19 = tpu.matmul %17, %18, %cst_16 {dimension_numbers = #tpu.dot_dimension_numbers<[1], [0], [0], [1], [0, 0, 1, 1], [], []>} : vector<8x128xf32>, vector<128x128xf32>, vector<8x128xf32> -> vector<8x128xf32>
      %c0_17 = arith.constant 0 : index
      %c0_18 = arith.constant 0 : index
      %20 = vector.load %arg4[%c0_17, %c0_18] : memref<1x128xf32, #tpu.memory_space<vmem>>, vector<1x128xf32>
      %21 = vector.broadcast %20 : vector<1x128xf32> to vector<8x128xf32>
      %22 = arith.addf %19, %21 : vector<8x128xf32>
      %cst_19 = arith.constant 0.000000e+00 : f32
      %23 = vector.broadcast %cst_19 : f32 to vector<8x128xf32>
      %24 = arith.maximumf %22, %23 : vector<8x128xf32>
      %c0_20 = arith.constant 0 : index
      %c0_21 = arith.constant 0 : index
      %25 = vector.load %arg9[%c0_20, %c0_21] : memref<8x128xf32, #tpu.memory_space<vmem>>, vector<8x128xf32>
      tpu.vector_store %arg9[%c0_20, %c0_21], %24 {strides = array<i32>} : memref<8x128xf32, #tpu.memory_space<vmem>>, vector<8x128xf32>,
    } else {
    }
    %c0 = arith.constant 0 : index
    %c0_1 = arith.constant 0 : index
    %3 = vector.load %arg9[%c0, %c0_1] : memref<8x128xf32, #tpu.memory_space<vmem>>, vector<8x128xf32>
    %c0_2 = arith.constant 0 : index
    %c0_3 = arith.constant 0 : index
    %c0_4 = arith.constant 0 : index
    %4 = vector.load %arg5[%c0_2, %c0_3, %c0_4] : memref<1x128x128xf32, #tpu.memory_space<vmem>>, vector<1x128x128xf32>
    %5 = vector.shape_cast %4 : vector<1x128x128xf32> to vector<128x128xf32>
    %cst = arith.constant dense<0.000000e+00> : vector<8x128xf32>
    %6 = tpu.matmul %3, %5, %cst {dimension_numbers = #tpu.dot_dimension_numbers<[1], [0], [0], [1], [0, 0, 1, 1], [], []>} : vector<8x128xf32>, vector<128x128xf32>, vector<8x128xf32> -> vector<8x128xf32>
    %c0_5 = arith.constant 0 : index
    %c0_6 = arith.constant 0 : index
    %c0_7 = arith.constant 0 : index
    %7 = vector.load %arg6[%c0_5, %c0_6, %c0_7] : memref<1x1x128xf32, #tpu.memory_space<vmem>>, vector<1x1x128xf32>
    %8 = vector.shape_cast %7 : vector<1x1x128xf32> to vector<1x128xf32>
    %9 = vector.broadcast %8 : vector<1x128xf32> to vector<8x128xf32>
    %10 = arith.addf %6, %9 : vector<8x128xf32>
    %cst_8 = arith.constant 0.000000e+00 : f32
    %11 = vector.broadcast %cst_8 : f32 to vector<8x128xf32>
    %12 = arith.maximumf %10, %11 : vector<8x128xf32>
    %c0_9 = arith.constant 0 : index
    %c0_10 = arith.constant 0 : index
    %13 = vector.load %arg9[%c0_9, %c0_10] : memref<8x128xf32, #tpu.memory_space<vmem>>, vector<8x128xf32>
    tpu.vector_store %arg9[%c0_9, %c0_10], %12 {strides = array<i32>} : memref<8x128xf32, #tpu.memory_space<vmem>>, vector<8x128xf32>,
    %c2_i32 = arith.constant 2 : i32
    %14 = arith.cmpi eq, %arg1, %c2_i32 : i32
    %15 = arith.extui %14 : i1 to i32
    %c0_i32_11 = arith.constant 0 : i32
    %16 = arith.cmpi ne, %15, %c0_i32_11 : i32
    scf.if %16 {
      %c0_12 = arith.constant 0 : index
      %c0_13 = arith.constant 0 : index
      %17 = vector.load %arg9[%c0_12, %c0_13] : memref<8x128xf32, #tpu.memory_space<vmem>>, vector<8x128xf32>
      %c0_14 = arith.constant 0 : index
      %c0_15 = arith.constant 0 : index
      %18 = vector.load %arg7[%c0_14, %c0_15] : memref<128x128xf32, #tpu.memory_space<vmem>>, vector<128x128xf32>
      %cst_16 = arith.constant dense<0.000000e+00> : vector<8x128xf32>
      %19 = tpu.matmul %17, %18, %cst_16 {dimension_numbers = #tpu.dot_dimension_numbers<[1], [0], [0], [1], [0, 0, 1, 1], [], []>} : vector<8x128xf32>, vector<128x128xf32>, vector<8x128xf32> -> vector<8x128xf32>
      %c0_17 = arith.constant 0 : index
      %c0_18 = arith.constant 0 : index
      %20 = vector.load %arg8[%c0_17, %c0_18] : memref<8x128xf32, #tpu.memory_space<vmem>>, vector<8x128xf32>
      tpu.vector_store %arg8[%c0_17, %c0_18], %19 {strides = array<i32>} : memref<8x128xf32, #tpu.memory_space<vmem>>, vector<8x128xf32>,
    } else {
    }
    return
  }
  func.func @transform_0(%arg0: i32, %arg1: i32) -> (i32, i32) {
    %c0_i32 = arith.constant 0 : i32
    %c0_i32_0 = arith.constant 0 : i32
    return %arg0, %c0_i32 : i32, i32
  }
  func.func @transform_1(%arg0: i32, %arg1: i32) -> (i32, i32) {
    %c0_i32 = arith.constant 0 : i32
    %c0_i32_0 = arith.constant 0 : i32
    %c0_i32_1 = arith.constant 0 : i32
    return %c0_i32, %c0_i32_0 : i32, i32
  }
  func.func @transform_2(%arg0: i32, %arg1: i32) -> (i32, i32) {
    %c0_i32 = arith.constant 0 : i32
    %c0_i32_0 = arith.constant 0 : i32
    %c0_i32_1 = arith.constant 0 : i32
    return %c0_i32, %c0_i32_0 : i32, i32
  }
  func.func @transform_3(%arg0: i32, %arg1: i32) -> (i32, i32, i32) {
    %c0_i32 = arith.constant 0 : i32
    %c0_i32_0 = arith.constant 0 : i32
    %c0_i32_1 = arith.constant 0 : i32
    return %arg1, %c0_i32, %c0_i32_0 : i32, i32, i32
  }
  func.func @transform_4(%arg0: i32, %arg1: i32) -> (i32, i32, i32) {
    %c0_i32 = arith.constant 0 : i32
    %c0_i32_0 = arith.constant 0 : i32
    %c0_i32_1 = arith.constant 0 : i32
    return %arg1, %c0_i32, %c0_i32_0 : i32, i32, i32
  }
  func.func @transform_5(%arg0: i32, %arg1: i32) -> (i32, i32) {
    %c0_i32 = arith.constant 0 : i32
    %c0_i32_0 = arith.constant 0 : i32
    %c0_i32_1 = arith.constant 0 : i32
    return %c0_i32, %c0_i32_0 : i32, i32
  }
  func.func @transform_6(%arg0: i32, %arg1: i32) -> (i32, i32) {
    %c0_i32 = arith.constant 0 : i32
    %c0_i32_0 = arith.constant 0 : i32
    return %arg0, %c0_i32 : i32, i32
  }
}

</mosaic_0001>

<llo_original>
// kernel: tpu_custom_call.1
$region0: #{tpu_custom_call.1}
  #allocation0 [shape = 'u32[]', space=smem, size = 0x4, offset = 0x4, fixed_abs, tag = 'smem constant byte address 0x4 - core index']
  #allocation1 [shape = 'u32[144,128]{1,0:T(1,128)}', space=vmem, size = 0x12000, scoped, tag = 'internal scratch']
  #allocation2 [shape = 'f32[8,128]{1,0:T(8,128)}', space=vmem, size = 0x1000, scoped, tag = 'scratch operand']
  %s0 = inlined_call_operand.hbm [shape: f32[8,128], index: 0, kind: input, shape index: {}]
  %s1 = inlined_call_operand.hbm [shape: f32[128,128], index: 1, kind: input, shape index: {}]
  %s2 = inlined_call_operand.vmem [shape: f32[1,128], index: 2, kind: input, shape index: {}]
  %s3 = inlined_call_operand.hbm [shape: f32[3,128,128], index: 3, kind: input, shape index: {}]
  %s4 = inlined_call_operand.vmem [shape: f32[3,1,128], index: 4, kind: input, shape index: {}]
  %s5 = inlined_call_operand.hbm [shape: f32[128,128], index: 5, kind: input, shape index: {}]
  %s6 = inlined_call_operand.hbm [shape: f32[8,128], index: 6, kind: output, shape index: {}]
  %s7 = sld [smem:[#allocation0]]
  $region81: #{tpu_custom_call.1} parent=0
    _
  %s9 = ssub.s32 1, %s7
  %s10 = scalar_select 0, %s9, %s7
  $region1: #{tpu_custom_call.1} parent=0
    #allocation3 [shape = 'u8[4096]{0}', space=vmem, size = 0x1000, scoped, tag = 'input window, operand 0, single buffered']
    #allocation4 [shape = 's32[2]{0}', space=sflag, size = 0x8, scoped, tag = 'scoped memory for tpu_custom_call.1']
    #allocation5 [shape = 's32[2]{0}', space=sflag, size = 0x8, scoped, tag = 'scoped memory for tpu_custom_call.1']
    #allocation6 [shape = 'u8[65536]{0}', space=vmem, size = 0x10000, scoped, tag = 'input window, operand 1, single buffered']
    #allocation7 [shape = 's32[1]{0}', space=sflag, size = 0x4, scoped, tag = 'scoped memory for tpu_custom_call.1']
    #allocation8 [shape = 'u8[131072]{0}', space=vmem, size = 0x20000, scoped, tag = 'input window, operand 3']
    #allocation9 [shape = 'u8[65536]{0}', space=vmem, size = 0x10000, scoped, tag = 'input window, operand 5, single buffered']
    #allocation10 [shape = 'u8[4096]{0}', space=vmem, size = 0x1000, scoped, tag = 'output window, operand 0, single buffered']
    %11 = vsyncpa [#allocation4], 0
    %12 = vsyncpa [#allocation7], 0
    %13 = vsyncpa [#allocation5], 0
    loop: start=0, step=1, limit=5
    $region2: #{tpu_custom_call.1} parent=1 // loop_pre_header
      _
    $region3: #{tpu_custom_call.1} parent=1 // loop_header
      %s15 = sphi 0, %s19
      %p16 = scmp.ge.s32.totalorder %s15, 5
      %s22 = sphi 0, %s34
      %s23 = sphi 0, %s30
      %s24 = sphi 0, %s22
      %s25 = sphi 0, %s23
      %s26 = sphi 0, %s24
      %s27 = sphi 0, %s25
      %s37 = sphi 0, %s39
      %s40 = sphi 0, %s37
      %s41 = sphi 0, %s40
      %s57 = sphi 0, %s41
      %s61 = sphi 0, %s61
      %s63 = sphi 0, %s61
      %s64 = sphi 0, %s63
      %s78 = sphi 0, %s64
      %s82 = sphi 0, %s82
      %s84 = sphi 0, %s82
      %s85 = sphi 0, %s84
      %s99 = sphi 0, %s85
      %s105 = sphi 0, %s107
      %s108 = sphi 0, %s105
      %s109 = sphi 0, %s108
      %s125 = sphi 0, %s109
      %s131 = sphi 0, %s133
      %s134 = sphi 0, %s131
      %s135 = sphi 0, %s134
      %s151 = sphi 0, %s135
      %s155 = sphi 0, %s155
      %s157 = sphi 0, %s155
      %s158 = sphi 0, %s157
      %s172 = sphi 0, %s158
      %s178 = sphi 0, %s180
      %s181 = sphi 0, %s178
      %s182 = sphi 0, %s181
      %s198 = sphi 0, %s182
    $region4: #{tpu_custom_call.1} parent=1 // loop_header_branch
      %18 = sbr.rel (%p16) target = $region8
    $region5: #{tpu_custom_call.1} parent=1 // loop_body
      %s20 = ssub.s32 %s15, 1
      %s21 = ssub.s32 %s15, 2
      %s28 = sadd.s32 1, %s23
      %p29 = scmp.ge.s32.totalorder %s28, 3
      %s30 = scalar_select %p29, 0, %s28
      %s31 = sadd.s32 1, %s22
      %s32 = scalar_select %p29, %s31, %s22
      %p33 = scmp.ge.s32.totalorder %s32, 1
      %s34 = scalar_select %p33, 0, %s32
      %s35 = ssub.s32 %s22, %s34
      %p36 = scmp.eq.s32.totalorder %s35, 0
      %s38 = sadd.s32 %s37, 1
      %s39 = scalar_select %p36, %s37, %s38
      %p42 = pneg %p36
      %p43 = scmp.eq.s32.totalorder %s15, 2
      %p44 = por %p42, %p43
      %p45 = scmp.ne.s32.totalorder %s37, %s40
      %p46 = scmp.eq.s32.totalorder %s15, 0
      %p47 = por %p45, %p46
      %p48 = scmp.ne.s32.totalorder %s37, %s40
      %p49 = scmp.eq.s32.totalorder %s20, 2
      %p50 = por %p48, %p49
      %p51 = scmp.ne.s32.totalorder %s40, %s41
      %p52 = scmp.eq.s32.totalorder %s20, 0
      %p53 = por %p51, %p52
      %p54 = scmp.ne.s32.totalorder %s40, %s41
      %p55 = scmp.eq.s32.totalorder %s21, 2
      %p56 = por %p54, %p55
      %p58 = scmp.ne.s32.totalorder %s41, %s57
      %p59 = scmp.eq.s32.totalorder %s21, 0
      %p60 = por %p58, %p59
      %s62 = sadd.s32 %s61, 1
      %p65 = scmp.eq.s32.totalorder %s15, 2
      %p66 = scmp.ne.s32.totalorder %s61, %s63
      %p67 = scmp.eq.s32.totalorder %s15, 0
      %p68 = por %p66, %p67
      %p69 = scmp.ne.s32.totalorder %s61, %s63
      %p70 = scmp.eq.s32.totalorder %s20, 2
      %p71 = por %p69, %p70
      %p72 = scmp.ne.s32.totalorder %s63, %s64
      %p73 = scmp.eq.s32.totalorder %s20, 0
      %p74 = por %p72, %p73
      %p75 = scmp.ne.s32.totalorder %s63, %s64
      %p76 = scmp.eq.s32.totalorder %s21, 2
      %p77 = por %p75, %p76
      %p79 = scmp.ne.s32.totalorder %s64, %s78
      %p80 = scmp.eq.s32.totalorder %s21, 0
      %p81 = por %p79, %p80
      %s83 = sadd.s32 %s82, 1
      %p86 = scmp.eq.s32.totalorder %s15, 2
      %p87 = scmp.ne.s32.totalorder %s82, %s84
      %p88 = scmp.eq.s32.totalorder %s15, 0
      %p89 = por %p87, %p88
      %p90 = scmp.ne.s32.totalorder %s82, %s84
      %p91 = scmp.eq.s32.totalorder %s20, 2
      %p92 = por %p90, %p91
      %p93 = scmp.ne.s32.totalorder %s84, %s85
      %p94 = scmp.eq.s32.totalorder %s20, 0
      %p95 = por %p93, %p94
      %p96 = scmp.ne.s32.totalorder %s84, %s85
      %p97 = scmp.eq.s32.totalorder %s21, 2
      %p98 = por %p96, %p97
      %p100 = scmp.ne.s32.totalorder %s85, %s99
      %p101 = scmp.eq.s32.totalorder %s21, 0
      %p102 = por %p100, %p101
      %s103 = ssub.s32 %s23, %s30
      %p104 = scmp.eq.s32.totalorder %s103, 0
      %s106 = sadd.s32 %s105, 1
      %s107 = scalar_select %p104, %s105, %s106
      %p110 = pneg %p104
      %p111 = scmp.eq.s32.totalorder %s15, 2
      %p112 = por %p110, %p111
      %p113 = scmp.ne.s32.totalorder %s105, %s108
      %p114 = scmp.eq.s32.totalorder %s15, 0
      %p115 = por %p113, %p114
      %p116 = scmp.ne.s32.totalorder %s105, %s108
      %p117 = scmp.eq.s32.totalorder %s20, 2
      %p118 = por %p116, %p117
      %p119 = scmp.ne.s32.totalorder %s108, %s109
      %p120 = scmp.eq.s32.totalorder %s20, 0
      %p121 = por %p119, %p120
      %p122 = scmp.ne.s32.totalorder %s108, %s109
      %p123 = scmp.eq.s32.totalorder %s21, 2
      %p124 = por %p122, %p123
      %p126 = scmp.ne.s32.totalorder %s109, %s125
      %p127 = scmp.eq.s32.totalorder %s21, 0
      %p128 = por %p126, %p127
      %s129 = ssub.s32 %s23, %s30
      %p130 = scmp.eq.s32.totalorder %s129, 0
      %s132 = sadd.s32 %s131, 1
      %s133 = scalar_select %p130, %s131, %s132
      %p136 = pneg %p130
      %p137 = scmp.eq.s32.totalorder %s15, 2
      %p138 = por %p136, %p137
      %p139 = scmp.ne.s32.totalorder %s131, %s134
      %p140 = scmp.eq.s32.totalorder %s15, 0
      %p141 = por %p139, %p140
      %p142 = scmp.ne.s32.totalorder %s131, %s134
      %p143 = scmp.eq.s32.totalorder %s20, 2
      %p144 = por %p142, %p143
      %p145 = scmp.ne.s32.totalorder %s134, %s135
      %p146 = scmp.eq.s32.totalorder %s20, 0
      %p147 = por %p145, %p146
      %p148 = scmp.ne.s32.totalorder %s134, %s135
      %p149 = scmp.eq.s32.totalorder %s21, 2
      %p150 = por %p148, %p149
      %p152 = scmp.ne.s32.totalorder %s135, %s151
      %p153 = scmp.eq.s32.totalorder %s21, 0
      %p154 = por %p152, %p153
      %s156 = sadd.s32 %s155, 1
      %p159 = scmp.eq.s32.totalorder %s15, 2
      %p160 = scmp.ne.s32.totalorder %s155, %s157
      %p161 = scmp.eq.s32.totalorder %s15, 0
      %p162 = por %p160, %p161
      %p163 = scmp.ne.s32.totalorder %s155, %s157
      %p164 = scmp.eq.s32.totalorder %s20, 2
      %p165 = por %p163, %p164
      %p166 = scmp.ne.s32.totalorder %s157, %s158
      %p167 = scmp.eq.s32.totalorder %s20, 0
      %p168 = por %p166, %p167
      %p169 = scmp.ne.s32.totalorder %s157, %s158
      %p170 = scmp.eq.s32.totalorder %s21, 2
      %p171 = por %p169, %p170
      %p173 = scmp.ne.s32.totalorder %s158, %s172
      %p174 = scmp.eq.s32.totalorder %s21, 0
      %p175 = por %p173, %p174
      %s176 = ssub.s32 %s22, %s34
      %p177 = scmp.eq.s32.totalorder %s176, 0
      %s179 = sadd.s32 %s178, 1
      %s180 = scalar_select %p177, %s178, %s179
      %p183 = pneg %p177
      %p184 = scmp.eq.s32.totalorder %s15, 2
      %p185 = por %p183, %p184
      %p186 = scmp.ne.s32.totalorder %s178, %s181
      %p187 = scmp.eq.s32.totalorder %s15, 0
      %p188 = por %p186, %p187
      %p189 = scmp.ne.s32.totalorder %s178, %s181
      %p190 = scmp.eq.s32.totalorder %s20, 2
      %p191 = por %p189, %p190
      %p192 = scmp.ne.s32.totalorder %s181, %s182
      %p193 = scmp.eq.s32.totalorder %s20, 0
      %p194 = por %p192, %p193
      %p195 = scmp.ne.s32.totalorder %s181, %s182
      %p196 = scmp.eq.s32.totalorder %s21, 2
      %p197 = por %p195, %p196
      %p199 = scmp.ne.s32.totalorder %s182, %s198
      %p200 = scmp.eq.s32.totalorder %s21, 0
      %p201 = por %p199, %p200
      %p202 = scmp.le.s32.totalorder 1, %s15
      %p203 = scmp.lt.s32.totalorder %s15, 4
      %p204 = pnand %p202, %p203
      %p205 = pneg %p204
      // Predicated region
      $region9: #{tpu_custom_call.1} parent=5 // pred_check
        _
      $region10: #{tpu_custom_call.1} parent=5 // pred_check_branch
        %207 = sbr.rel (%p204) target = $region12
      $region11: #{tpu_custom_call.1} parent=5 // pred_region
        %s208 = ssub.s32 %s15, 1
        // Predicated region
        $region13: #{tpu_custom_call.1} parent=11 // pred_check
          %p209 = pneg %p53
        $region14: #{tpu_custom_call.1} parent=11 // pred_check_branch
          %211 = sbr.rel (%p209) target = $region16
        $region15: #{tpu_custom_call.1} parent=11 // pred_region
          %s213 = ssub.s32 128, 128
          %214 = vsyncadd [#allocation4], %s213
          %s215 = smul.addr %s24, 128
          %s216 = scalar_lea.hbm %s0, %s215
          %s218 = sshll.u32 [#allocation3], 4
          %s219 = int_to_ptr.vmem [resolvable:$true] %s218
          %221 = dma.hbm_to_vmem [thread:$0]  %s216, 128, %s219, [#allocation4]
        $region16: #{tpu_custom_call.1} parent=11 // pred_fallthru
          _
        // Predicated region
        $region17: #{tpu_custom_call.1} parent=11 // pred_check
          %p222 = pneg %p74
        $region18: #{tpu_custom_call.1} parent=11 // pred_check_branch
          %224 = sbr.rel (%p222) target = $region20
        $region19: #{tpu_custom_call.1} parent=11 // pred_region
          %s226 = ssub.s32 2048, 2048
          %227 = vsyncadd [#allocation7], %s226
          %s228 = sshll.u32 [#allocation6], 4
          %s229 = int_to_ptr.vmem [resolvable:$true] %s228
          %234 = dma.hbm_to_vmem [thread:$0]  %s1, 2048, %s229, [#allocation7], 128, 128, 8
        $region20: #{tpu_custom_call.1} parent=11 // pred_fallthru
          _
        // Predicated region
        $region21: #{tpu_custom_call.1} parent=11 // pred_check
          %p235 = pneg %p95
        $region22: #{tpu_custom_call.1} parent=11 // pred_check_branch
          %237 = sbr.rel (%p235) target = $region24
        $region23: #{tpu_custom_call.1} parent=11 // pred_region
          _
        $region24: #{tpu_custom_call.1} parent=11 // pred_fallthru
          _
        // Predicated region
        $region25: #{tpu_custom_call.1} parent=11 // pred_check
          %p238 = pneg %p168
        $region26: #{tpu_custom_call.1} parent=11 // pred_check_branch
          %240 = sbr.rel (%p238) target = $region28
        $region27: #{tpu_custom_call.1} parent=11 // pred_region
          %s242 = ssub.s32 2048, 2048
          %243 = vsyncadd [#allocation7], %s242
          %s244 = sshll.u32 [#allocation9], 4
          %s245 = int_to_ptr.vmem [resolvable:$true] %s244
          %250 = dma.hbm_to_vmem [thread:$0]  %s5, 2048, %s245, [#allocation7], 128, 128, 8
        $region28: #{tpu_custom_call.1} parent=11 // pred_fallthru
          _
      $region12: #{tpu_custom_call.1} parent=5 // pred_fallthru
        _
      %p251 = scmp.lt.s32.totalorder %s15, 3
      // Predicated region
      $region29: #{tpu_custom_call.1} parent=5 // pred_check
        %p252 = pneg %p251
      $region30: #{tpu_custom_call.1} parent=5 // pred_check_branch
        %254 = sbr.rel (%p252) target = $region32
      $region31: #{tpu_custom_call.1} parent=5 // pred_region
        // Predicated region
        $region33: #{tpu_custom_call.1} parent=31 // pred_check
          %p255 = pneg %p115
        $region34: #{tpu_custom_call.1} parent=31 // pred_check_branch
          %257 = sbr.rel (%p255) target = $region36
        $region35: #{tpu_custom_call.1} parent=31 // pred_region
          %s258 = sand.u32 %s15, 1
          %s259 = scalar_lea.sflag [#allocation4], %s258
          %s260 = sand.u32 %s105, 1
          %s261 = smul.addr %s260, 128
          %s262 = scalar_lea.vmem [#allocation8], %s261
          %s264 = ssub.s32 2048, 2048
          %265 = vsyncadd %s259, %s264
          %s266 = smul.addr %s23, 16
          %s267 = smul.addr %s266, 128
          %s268 = scalar_lea.hbm %s3, %s267
          %s269 = sshll.u32 %s262, 4
          %s270 = int_to_ptr.vmem [resolvable:$true] %s269
          %275 = dma.hbm_to_vmem [thread:$0]  %s268, 2048, %s270, %s259, 128, 128, 8
        $region36: #{tpu_custom_call.1} parent=31 // pred_fallthru
          _
        // Predicated region
        $region37: #{tpu_custom_call.1} parent=31 // pred_check
          %p276 = pneg %p141
        $region38: #{tpu_custom_call.1} parent=31 // pred_check_branch
          %278 = sbr.rel (%p276) target = $region40
        $region39: #{tpu_custom_call.1} parent=31 // pred_region
          %p279 = scmp.lt.s32.totalorder %s23, 2
          %s280 = scalar_select %p279, %s23, 2
          %s281 = scalar_lea.vmem %s4, %s280
        $region40: #{tpu_custom_call.1} parent=31 // pred_fallthru
          _
      $region32: #{tpu_custom_call.1} parent=5 // pred_fallthru
        _
      %p282 = scmp.le.s32.totalorder 1, %s15
      %p283 = scmp.lt.s32.totalorder %s15, 4
      %p284 = pnand %p282, %p283
      %p285 = pneg %p284
      // Predicated region
      $region41: #{tpu_custom_call.1} parent=5 // pred_check
        _
      $region42: #{tpu_custom_call.1} parent=5 // pred_check_branch
        %287 = sbr.rel (%p284) target = $region44
      $region43: #{tpu_custom_call.1} parent=5 // pred_region
        %s288 = ssub.s32 %s15, 1
        // Predicated region
        $region45: #{tpu_custom_call.1} parent=43 // pred_check
          %p289 = pneg %p53
        $region46: #{tpu_custom_call.1} parent=43 // pred_check_branch
          %291 = sbr.rel (%p289) target = $region48
        $region47: #{tpu_custom_call.1} parent=43 // pred_region
          %292 = dma.done [#allocation4], 128
        $region48: #{tpu_custom_call.1} parent=43 // pred_fallthru
          _
        // Predicated region
        $region49: #{tpu_custom_call.1} parent=43 // pred_check
          %p293 = pneg %p74
        $region50: #{tpu_custom_call.1} parent=43 // pred_check_branch
          %295 = sbr.rel (%p293) target = $region52
        $region51: #{tpu_custom_call.1} parent=43 // pred_region
          %296 = dma.done [#allocation7], 2048
        $region52: #{tpu_custom_call.1} parent=43 // pred_fallthru
          _
        %s297 = sand.u32 %s20, 1
        %s298 = scalar_lea.sflag [#allocation4], %s297
        %s299 = sand.u32 %s108, 1
        %s300 = smul.addr %s299, 128
        %s301 = scalar_lea.vmem [#allocation8], %s300
        // Predicated region
        $region53: #{tpu_custom_call.1} parent=43 // pred_check
          %p302 = pneg %p121
        $region54: #{tpu_custom_call.1} parent=43 // pred_check_branch
          %304 = sbr.rel (%p302) target = $region56
        $region55: #{tpu_custom_call.1} parent=43 // pred_region
          %305 = dma.done %s298, 2048
        $region56: #{tpu_custom_call.1} parent=43 // pred_fallthru
          _
        // Predicated region
        $region57: #{tpu_custom_call.1} parent=43 // pred_check
          %p306 = pneg %p168
        $region58: #{tpu_custom_call.1} parent=43 // pred_check_branch
          %308 = sbr.rel (%p306) target = $region60
        $region59: #{tpu_custom_call.1} parent=43 // pred_region
          %309 = dma.done [#allocation7], 2048
        $region60: #{tpu_custom_call.1} parent=43 // pred_fallthru
          _
        %p310 = pneg %p53
        %p311 = pneg %p50
        %p312 = pneg %p74
        %p313 = pneg %p71
        %p314 = pneg %p95
        %p315 = pneg %p92
        %s316 = sand.u32 %s20, 1
        %s317 = scalar_lea.sflag [#allocation4], %s316
        %s318 = sand.u32 %s108, 1
        %s319 = smul.addr %s318, 128
        %s320 = scalar_lea.vmem [#allocation8], %s319
        %p321 = pneg %p121
        %p322 = pneg %p118
        %p323 = scmp.lt.s32.totalorder %s25, 2
        %s324 = scalar_select %p323, %s25, 2
        %s325 = scalar_lea.vmem %s4, %s324
        %p326 = pneg %p147
        %p327 = pneg %p144
        %p328 = pneg %p168
        %p329 = pneg %p165
        %p330 = pneg %p194
        %p331 = pneg %p191
        %p332 = scmp.lt.s32.totalorder %s25, 2
        %s333 = scalar_select %p332, %s25, 2
        %s334 = scalar_lea.vmem %s4, %s333
        %p335 = scmp.eq.s32.totalorder %s25, 0
        // Predicated region
        $region61: #{tpu_custom_call.1} parent=43 // pred_check
          %p336 = pneg %p335
        $region62: #{tpu_custom_call.1} parent=43 // pred_check_branch
          %338 = sbr.rel (%p336) target = $region64
        $region63: #{tpu_custom_call.1} parent=43 // pred_region
          %v339 = vld [vmem:[#allocation3] sm:$0xff]
          %v340 = vld [vmem:[#allocation6] sm:$0xff]
          %v341 = vld [vmem:[#allocation6 + $0x8] sm:$0xff]
          %v342 = vld [vmem:[#allocation6 + $0x10] sm:$0xff]
          %v343 = vld [vmem:[#allocation6 + $0x18] sm:$0xff]
          %v344 = vld [vmem:[#allocation6 + $0x20] sm:$0xff]
          %v345 = vld [vmem:[#allocation6 + $0x28] sm:$0xff]
          %v346 = vld [vmem:[#allocation6 + $0x30] sm:$0xff]
          %v347 = vld [vmem:[#allocation6 + $0x38] sm:$0xff]
          %v348 = vld [vmem:[#allocation6 + $0x40] sm:$0xff]
          %v349 = vld [vmem:[#allocation6 + $0x48] sm:$0xff]
          %v350 = vld [vmem:[#allocation6 + $0x50] sm:$0xff]
          %v351 = vld [vmem:[#allocation6 + $0x58] sm:$0xff]
          %v352 = vld [vmem:[#allocation6 + $0x60] sm:$0xff]
          %v353 = vld [vmem:[#allocation6 + $0x68] sm:$0xff]
          %v354 = vld [vmem:[#allocation6 + $0x70] sm:$0xff]
          %v355 = vld [vmem:[#allocation6 + $0x78] sm:$0xff]
          %v356 = vld [vmem:[%s2] sm:$0x1]
          %v358 = vlaneseq
          %v359 = vshrl.u32 %v358, 7
          %v360 = vsub.s32 0, %v359
          %v361 = vrot.slane %v356, %v360
          %363 = vmatprep.subr.mxu0 0.0
          %364 = vmatpush1.msra.mxu0 %v340
          %365 = vmatprep.subr.mxu0 0.0
          %366 = vmatpush1.msra.mxu0 %v341
          %367 = vmatprep.subr.mxu0 0.0
          %368 = vmatpush1.msra.mxu0 %v342
          %369 = vmatprep.subr.mxu0 0.0
          %370 = vmatpush1.msra.mxu0 %v343
          %371 = vmatprep.subr.mxu0 0.0
          %372 = vmatpush1.msra.mxu0 %v344
          %373 = vmatprep.subr.mxu0 0.0
          %374 = vmatpush1.msra.mxu0 %v345
          %375 = vmatprep.subr.mxu0 0.0
          %376 = vmatpush1.msra.mxu0 %v346
          %377 = vmatprep.subr.mxu0 0.0
          %378 = vmatpush1.msra.mxu0 %v347
          %379 = vmatprep.subr.mxu0 0.0
          %380 = vmatpush1.msra.mxu0 %v348
          %381 = vmatprep.subr.mxu0 0.0
          %382 = vmatpush1.msra.mxu0 %v349
          %383 = vmatprep.subr.mxu0 0.0
          %384 = vmatpush1.msra.mxu0 %v350
          %385 = vmatprep.subr.mxu0 0.0
          %386 = vmatpush1.msra.mxu0 %v351
          %387 = vmatprep.subr.mxu0 0.0
          %388 = vmatpush1.msra.mxu0 %v352
          %389 = vmatprep.subr.mxu0 0.0
          %390 = vmatpush1.msra.mxu0 %v353
          %391 = vmatprep.subr.mxu0 0.0
          %392 = vmatpush1.msra.mxu0 %v354
          %393 = vmatprep.subr.mxu0 0.0
          %394 = vmatpush1.msra.mxu0 %v355
          %395 = vmatprep.subr.mxu0 0.0
          %396 = vmatpush1.msra.mxu0 0.0
          %397 = vmatprep.subr.mxu0 0.0
          %398 = vmatpush1.msra.mxu0 0.0
          %399 = vmatprep.subr.mxu0 0.0
          %400 = vmatpush1.msra.mxu0 0.0
          %401 = vmatprep.subr.mxu0 0.0
          %402 = vmatpush1.msra.mxu0 0.0
          %403 = vmatprep.subr.mxu0 0.0
          %404 = vmatpush1.msra.mxu0 0.0
          %405 = vmatprep.subr.mxu0 0.0
          %406 = vmatpush1.msra.mxu0 0.0
          %407 = vmatprep.subr.mxu0 0.0
          %408 = vmatpush1.msra.mxu0 0.0
          %409 = vmatprep.subr.mxu0 0.0
          %410 = vmatpush1.msra.mxu0 0.0
          %411 = vmatprep.subr.mxu0 0.0
          %412 = vmatpush1.msra.mxu0 0.0
          %413 = vmatprep.subr.mxu0 0.0
          %414 = vmatpush1.msra.mxu0 0.0
          %415 = vmatprep.subr.mxu0 0.0
          %416 = vmatpush1.msra.mxu0 0.0
          %417 = vmatprep.subr.mxu0 0.0
          %418 = vmatpush1.msra.mxu0 0.0
          %419 = vmatprep.subr.mxu0 0.0
          %420 = vmatpush1.msra.mxu0 0.0
          %421 = vmatprep.subr.mxu0 0.0
          %422 = vmatpush1.msra.mxu0 0.0
          %423 = vmatprep.subr.mxu0 0.0
          %424 = vmatpush1.msra.mxu0 0.0
          %425 = vmatprep.subr.mxu0 0.0
          %426 = vmatpush1.msra.mxu0 0.0
          %427 = vmatprep.mubr.f32.mxu0 0.0
          %428 = vmatmul.mubr.f32.gmra.mrb[0].mxu0 %v339
          %v429 = vpop.f32.mrb[0].mxu0
          %v430 = vadd.f32 %v361, %v429
          %v431 = vpop.f32.mrb[0].mxu0
          %432 = vdwg.mxu0
          %v433 = vmax.f32 %v430, 0.0
          %434 = vst [vmem:[#allocation2] sm:$0xff] %v433
        $region64: #{tpu_custom_call.1} parent=43 // pred_fallthru
          _
        %v435 = vld [vmem:[#allocation2] sm:$0xff]
        %v436 = vld [vmem:[%s301] sm:$0xff]
        %v437 = vld [vmem:[%s301 + $0x8] sm:$0xff]
        %v438 = vld [vmem:[%s301 + $0x10] sm:$0xff]
        %v439 = vld [vmem:[%s301 + $0x18] sm:$0xff]
        %v440 = vld [vmem:[%s301 + $0x20] sm:$0xff]
        %v441 = vld [vmem:[%s301 + $0x28] sm:$0xff]
        %v442 = vld [vmem:[%s301 + $0x30] sm:$0xff]
        %v443 = vld [vmem:[%s301 + $0x38] sm:$0xff]
        %v444 = vld [vmem:[%s301 + $0x40] sm:$0xff]
        %v445 = vld [vmem:[%s301 + $0x48] sm:$0xff]
        %v446 = vld [vmem:[%s301 + $0x50] sm:$0xff]
        %v447 = vld [vmem:[%s301 + $0x58] sm:$0xff]
        %v448 = vld [vmem:[%s301 + $0x60] sm:$0xff]
        %v449 = vld [vmem:[%s301 + $0x68] sm:$0xff]
        %v450 = vld [vmem:[%s301 + $0x70] sm:$0xff]
        %v451 = vld [vmem:[%s301 + $0x78] sm:$0xff]
        %v452 = vld [vmem:[%s334] sm:$0x1]
        %v454 = vlaneseq
        %v455 = vshrl.u32 %v454, 7
        %v456 = vsub.s32 0, %v455
        %v457 = vrot.slane %v452, %v456
        %459 = vmatprep.subr.mxu0 0.0
        %460 = vmatpush1.msra.mxu0 %v436
        %461 = vmatprep.subr.mxu0 0.0
        %462 = vmatpush1.msra.mxu0 %v437
        %463 = vmatprep.subr.mxu0 0.0
        %464 = vmatpush1.msra.mxu0 %v438
        %465 = vmatprep.subr.mxu0 0.0
        %466 = vmatpush1.msra.mxu0 %v439
        %467 = vmatprep.subr.mxu0 0.0
        %468 = vmatpush1.msra.mxu0 %v440
        %469 = vmatprep.subr.mxu0 0.0
        %470 = vmatpush1.msra.mxu0 %v441
        %471 = vmatprep.subr.mxu0 0.0
        %472 = vmatpush1.msra.mxu0 %v442
        %473 = vmatprep.subr.mxu0 0.0
        %474 = vmatpush1.msra.mxu0 %v443
        %475 = vmatprep.subr.mxu0 0.0
        %476 = vmatpush1.msra.mxu0 %v444
        %477 = vmatprep.subr.mxu0 0.0
        %478 = vmatpush1.msra.mxu0 %v445
        %479 = vmatprep.subr.mxu0 0.0
        %480 = vmatpush1.msra.mxu0 %v446
        %481 = vmatprep.subr.mxu0 0.0
        %482 = vmatpush1.msra.mxu0 %v447
        %483 = vmatprep.subr.mxu0 0.0
        %484 = vmatpush1.msra.mxu0 %v448
        %485 = vmatprep.subr.mxu0 0.0
        %486 = vmatpush1.msra.mxu0 %v449
        %487 = vmatprep.subr.mxu0 0.0
        %488 = vmatpush1.msra.mxu0 %v450
        %489 = vmatprep.subr.mxu0 0.0
        %490 = vmatpush1.msra.mxu0 %v451
        %491 = vmatprep.subr.mxu0 0.0
        %492 = vmatpush1.msra.mxu0 0.0
        %493 = vmatprep.subr.mxu0 0.0
        %494 = vmatpush1.msra.mxu0 0.0
        %495 = vmatprep.subr.mxu0 0.0
        %496 = vmatpush1.msra.mxu0 0.0
        %497 = vmatprep.subr.mxu0 0.0
        %498 = vmatpush1.msra.mxu0 0.0
        %499 = vmatprep.subr.mxu0 0.0
        %500 = vmatpush1.msra.mxu0 0.0
        %501 = vmatprep.subr.mxu0 0.0
        %502 = vmatpush1.msra.mxu0 0.0
        %503 = vmatprep.subr.mxu0 0.0
        %504 = vmatpush1.msra.mxu0 0.0
        %505 = vmatprep.subr.mxu0 0.0
        %506 = vmatpush1.msra.mxu0 0.0
        %507 = vmatprep.subr.mxu0 0.0
        %508 = vmatpush1.msra.mxu0 0.0
        %509 = vmatprep.subr.mxu0 0.0
        %510 = vmatpush1.msra.mxu0 0.0
        %511 = vmatprep.subr.mxu0 0.0
        %512 = vmatpush1.msra.mxu0 0.0
        %513 = vmatprep.subr.mxu0 0.0
        %514 = vmatpush1.msra.mxu0 0.0
        %515 = vmatprep.subr.mxu0 0.0
        %516 = vmatpush1.msra.mxu0 0.0
        %517 = vmatprep.subr.mxu0 0.0
        %518 = vmatpush1.msra.mxu0 0.0
        %519 = vmatprep.subr.mxu0 0.0
        %520 = vmatpush1.msra.mxu0 0.0
        %521 = vmatprep.subr.mxu0 0.0
        %522 = vmatpush1.msra.mxu0 0.0
        %523 = vmatprep.mubr.f32.mxu0 0.0
        %524 = vmatmul.mubr.f32.gmra.mrb[0].mxu0 %v435
        %v525 = vpop.f32.mrb[0].mxu0
        %v526 = vadd.f32 %v457, %v525
        %v527 = vpop.f32.mrb[0].mxu0
        %528 = vdwg.mxu0
        %v529 = vmax.f32 %v526, 0.0
        %530 = vst [vmem:[#allocation2] sm:$0xff] %v529
        %p531 = scmp.eq.s32.totalorder %s25, 2
        // Predicated region
        $region65: #{tpu_custom_call.1} parent=43 // pred_check
          %p532 = pneg %p531
        $region66: #{tpu_custom_call.1} parent=43 // pred_check_branch
          %534 = sbr.rel (%p532) target = $region68
        $region67: #{tpu_custom_call.1} parent=43 // pred_region
          %v535 = vld [vmem:[#allocation2] sm:$0xff]
          %v536 = vld [vmem:[#allocation9] sm:$0xff]
          %v537 = vld [vmem:[#allocation9 + $0x8] sm:$0xff]
          %v538 = vld [vmem:[#allocation9 + $0x10] sm:$0xff]
          %v539 = vld [vmem:[#allocation9 + $0x18] sm:$0xff]
          %v540 = vld [vmem:[#allocation9 + $0x20] sm:$0xff]
          %v541 = vld [vmem:[#allocation9 + $0x28] sm:$0xff]
          %v542 = vld [vmem:[#allocation9 + $0x30] sm:$0xff]
          %v543 = vld [vmem:[#allocation9 + $0x38] sm:$0xff]
          %v544 = vld [vmem:[#allocation9 + $0x40] sm:$0xff]
          %v545 = vld [vmem:[#allocation9 + $0x48] sm:$0xff]
          %v546 = vld [vmem:[#allocation9 + $0x50] sm:$0xff]
          %v547 = vld [vmem:[#allocation9 + $0x58] sm:$0xff]
          %v548 = vld [vmem:[#allocation9 + $0x60] sm:$0xff]
          %v549 = vld [vmem:[#allocation9 + $0x68] sm:$0xff]
          %v550 = vld [vmem:[#allocation9 + $0x70] sm:$0xff]
          %v551 = vld [vmem:[#allocation9 + $0x78] sm:$0xff]
          %552 = vmatprep.subr.mxu0 0.0
          %553 = vmatpush1.msra.mxu0 %v536
          %554 = vmatprep.subr.mxu0 0.0
          %555 = vmatpush1.msra.mxu0 %v537
          %556 = vmatprep.subr.mxu0 0.0
          %557 = vmatpush1.msra.mxu0 %v538
          %558 = vmatprep.subr.mxu0 0.0
          %559 = vmatpush1.msra.mxu0 %v539
          %560 = vmatprep.subr.mxu0 0.0
          %561 = vmatpush1.msra.mxu0 %v540
          %562 = vmatprep.subr.mxu0 0.0
          %563 = vmatpush1.msra.mxu0 %v541
          %564 = vmatprep.subr.mxu0 0.0
          %565 = vmatpush1.msra.mxu0 %v542
          %566 = vmatprep.subr.mxu0 0.0
          %567 = vmatpush1.msra.mxu0 %v543
          %568 = vmatprep.subr.mxu0 0.0
          %569 = vmatpush1.msra.mxu0 %v544
          %570 = vmatprep.subr.mxu0 0.0
          %571 = vmatpush1.msra.mxu0 %v545
          %572 = vmatprep.subr.mxu0 0.0
          %573 = vmatpush1.msra.mxu0 %v546
          %574 = vmatprep.subr.mxu0 0.0
          %575 = vmatpush1.msra.mxu0 %v547
          %576 = vmatprep.subr.mxu0 0.0
          %577 = vmatpush1.msra.mxu0 %v548
          %578 = vmatprep.subr.mxu0 0.0
          %579 = vmatpush1.msra.mxu0 %v549
          %580 = vmatprep.subr.mxu0 0.0
          %581 = vmatpush1.msra.mxu0 %v550
          %582 = vmatprep.subr.mxu0 0.0
          %583 = vmatpush1.msra.mxu0 %v551
          %584 = vmatprep.subr.mxu0 0.0
          %585 = vmatpush1.msra.mxu0 0.0
          %586 = vmatprep.subr.mxu0 0.0
          %587 = vmatpush1.msra.mxu0 0.0
          %588 = vmatprep.subr.mxu0 0.0
          %589 = vmatpush1.msra.mxu0 0.0
          %590 = vmatprep.subr.mxu0 0.0
          %591 = vmatpush1.msra.mxu0 0.0
          %592 = vmatprep.subr.mxu0 0.0
          %593 = vmatpush1.msra.mxu0 0.0
          %594 = vmatprep.subr.mxu0 0.0
          %595 = vmatpush1.msra.mxu0 0.0
          %596 = vmatprep.subr.mxu0 0.0
          %597 = vmatpush1.msra.mxu0 0.0
          %598 = vmatprep.subr.mxu0 0.0
          %599 = vmatpush1.msra.mxu0 0.0
          %600 = vmatprep.subr.mxu0 0.0
          %601 = vmatpush1.msra.mxu0 0.0
          %602 = vmatprep.subr.mxu0 0.0
          %603 = vmatpush1.msra.mxu0 0.0
          %604 = vmatprep.subr.mxu0 0.0
          %605 = vmatpush1.msra.mxu0 0.0
          %606 = vmatprep.subr.mxu0 0.0
          %607 = vmatpush1.msra.mxu0 0.0
          %608 = vmatprep.subr.mxu0 0.0
          %609 = vmatpush1.msra.mxu0 0.0
          %610 = vmatprep.subr.mxu0 0.0
          %611 = vmatpush1.msra.mxu0 0.0
          %612 = vmatprep.subr.mxu0 0.0
          %613 = vmatpush1.msra.mxu0 0.0
          %614 = vmatprep.subr.mxu0 0.0
          %615 = vmatpush1.msra.mxu0 0.0
          %616 = vmatprep.mubr.f32.mxu0 0.0
          %617 = vmatmul.mubr.f32.gmra.mrb[0].mxu0 %v535
          %v618 = vpop.f32.mrb[0].mxu0
          %v619 = vadd.f32 0.0, %v618
          %v620 = vpop.f32.mrb[0].mxu0
          %621 = vdwg.mxu0
          %622 = vst [vmem:[#allocation10] sm:$0xff] %v619
        $region68: #{tpu_custom_call.1} parent=43 // pred_fallthru
          _
        // Predicated region
        $region69: #{tpu_custom_call.1} parent=43 // pred_check
          %p623 = pneg %p191
        $region70: #{tpu_custom_call.1} parent=43 // pred_check_branch
          %625 = sbr.rel (%p623) target = $region72
        $region71: #{tpu_custom_call.1} parent=43 // pred_region
          %s627 = ssub.s32 128, 128
          %628 = vsyncadd [#allocation5], %s627
          %s629 = smul.addr %s24, 128
          %s630 = scalar_lea.hbm %s6, %s629
          %s632 = sshll.u32 [#allocation10], 4
          %s633 = int_to_ptr.vmem [resolvable:$true] %s632
          %635 = dma.vmem_to_hbm [thread:$0]  %s633, 128, %s630, [#allocation5]
        $region72: #{tpu_custom_call.1} parent=43 // pred_fallthru
          _
        // Predicated region
        $region73: #{tpu_custom_call.1} parent=43 // pred_check
          %p636 = pneg %p191
        $region74: #{tpu_custom_call.1} parent=43 // pred_check_branch
          %638 = sbr.rel (%p636) target = $region76
        $region75: #{tpu_custom_call.1} parent=43 // pred_region
          %639 = dma.done [#allocation5], 128
        $region76: #{tpu_custom_call.1} parent=43 // pred_fallthru
          _
      $region44: #{tpu_custom_call.1} parent=5 // pred_fallthru
        _
      %p640 = scmp.le.s32.totalorder 2, %s15
      // Predicated region
      $region77: #{tpu_custom_call.1} parent=5 // pred_check
        %p641 = pneg %p640
      $region78: #{tpu_custom_call.1} parent=5 // pred_check_branch
        %643 = sbr.rel (%p641) target = $region80
      $region79: #{tpu_custom_call.1} parent=5 // pred_region
        %s644 = ssub.s32 %s15, 2
      $region80: #{tpu_custom_call.1} parent=5 // pred_fallthru
        _
    $region6: #{tpu_custom_call.1} parent=1 // loop_footer
      %s19 = sadd.s32 1, %s15
    $region7: #{tpu_custom_call.1} parent=1 // loop_footer_branch
      %14 = sbr.rel target = $region3
    $region8: #{tpu_custom_call.1} parent=1 // loop_exit
      _
    %645 = vsyncpa [#allocation4], 1
    %s646 = scalar_lea.sflag [#allocation4], 1
    %647 = vsyncpa %s646, 1
    %648 = vsyncpa [#allocation7], 1
    %649 = vsyncpa [#allocation5], 1
    %s650 = scalar_lea.sflag [#allocation5], 1
    %651 = vsyncpa %s650, 1

</llo_original>
